<compile_context>
chip_gen: v7x
topology: tpu7x:2x2x1
jax: 0.10.0
libtpu: 0.0.40
codegen_flags: <defaults>
</compile_context>

<pallas_src>
import jax
import jax.numpy as jnp
from jax.experimental import pallas as pl
from jax.experimental.pallas import tpu as pltpu


def _round_up(x, m):
    return ((x + m - 1) // m) * m


def _cdiv(a, b):
    return (a + b - 1) // b


# --------------------------------------------------------------------------
# helper: lane-dense (1, t) row -> (t, 1) sublane column without a transpose
# --------------------------------------------------------------------------
def _lane_row_to_col(row_f32):
    t = row_f32.shape[1]
    b = jnp.broadcast_to(row_f32, (t, t))                       # sublane broadcast
    eye = (jax.lax.broadcasted_iota(jnp.int32, (t, t), 0)
           == jax.lax.broadcasted_iota(jnp.int32, (t, t), 1))
    return jnp.sum(jnp.where(eye, b, 0.0), axis=1, keepdims=True)


# --------------------------------------------------------------------------
# Fused cross-entropy loss + accuracy kernel (row-tiled reduction)
# --------------------------------------------------------------------------
def _make_ce_acc_kernel(n_rows, tile_r, n_pad):
    inv_n = 1.0 / float(n_rows)

    def kernel(logits_ref, labels_ref, loss_ref, acc_ref, lsum, csum):
        i = pl.program_id(0)

        @pl.when(i == 0)
        def _init():
            lsum[...] = jnp.zeros_like(lsum)
            csum[...] = jnp.zeros_like(csum)

        x = logits_ref[...]                                          # (tile_r, n_pad) f32
        lab_row = labels_ref[pl.ds(i, 1), :].astype(jnp.float32)     # (1, tile_r)
        lab_col = _lane_row_to_col(lab_row)                          # (tile_r, 1)

        row_ids = i * tile_r + jax.lax.broadcasted_iota(jnp.int32, (tile_r, 1), 0)
        valid = (row_ids < n_rows).astype(jnp.float32)               # (tile_r, 1)

        # numerically-stable log-sum-exp (padded classes are -1e30 -> exp == 0)
        m = jnp.max(x, axis=-1, keepdims=True)                       # (tile_r, 1)
        lse = m + jnp.log(jnp.sum(jnp.exp(x - m), axis=-1, keepdims=True))

        colf = jax.lax.broadcasted_iota(jnp.int32, x.shape, 1).astype(jnp.float32)
        picked = jnp.sum(jnp.where(colf == lab_col, x, 0.0), axis=-1, keepdims=True)
        per_row = (lse - picked) * valid                             # (tile_r, 1)

        # argmax (first index achieving the max) for fused accuracy
        pred = jnp.min(jnp.where(x == m, colf, float(n_pad)), axis=-1, keepdims=True)
        correct = (pred == lab_col).astype(jnp.float32) * valid

        lsum[...] += jnp.sum(per_row, axis=0, keepdims=True) * inv_n
        csum[...] += jnp.sum(correct, axis=0, keepdims=True) * inv_n

        @pl.when(i == pl.num_programs(0) - 1)
        def _fin():
            loss_ref[...] = lsum[...]
            acc_ref[...] = csum[...]

    return kernel


def _ce_loss_acc_pallas(logits_2d, labels_1d):
    r, n = logits_2d.shape
    n_pad = _round_up(n, 128)                      # lane-dense class axis
    tile_r = min(128, _round_up(r, 8))             # sublane-aligned row tile
    r_pad = _round_up(r, tile_r)
    num_tiles = r_pad // tile_r

    x = jnp.pad(logits_2d.astype(jnp.float32),
                ((0, r_pad - r), (0, n_pad - n)), constant_values=-1e30)
    lab = jnp.pad(labels_1d.reshape(-1).astype(jnp.int32),
                  (0, r_pad - r), constant_values=0).reshape(num_tiles, tile_r)

    loss, acc = pl.pallas_call(
        _make_ce_acc_kernel(r, tile_r, n_pad),
        out_shape=(jax.ShapeDtypeStruct((1, 1), jnp.float32),
                   jax.ShapeDtypeStruct((1, 1), jnp.float32)),
        grid=(num_tiles,),
        in_specs=[pl.BlockSpec((tile_r, n_pad), lambda i: (i, 0)),
                  # tiny lane-dense label table: fully resident in VMEM
                  pl.BlockSpec(memory_space=pltpu.MemorySpace.VMEM)],
        out_specs=(pl.BlockSpec(memory_space=pltpu.MemorySpace.VMEM),
                   pl.BlockSpec(memory_space=pltpu.MemorySpace.VMEM)),
        scratch_shapes=[pltpu.VMEM((1, 1), jnp.float32),
                        pltpu.VMEM((1, 1), jnp.float32)],
        compiler_params=pltpu.CompilerParams(dimension_semantics=("arbitrary",)),
    )(x, lab)
    return loss[0, 0], acc[0, 0]


# --------------------------------------------------------------------------
# Generic tiled mean-reduction kernel (used for BCE-with-logits and accuracy)
# Padded elements must evaluate to 0 under elem_fn; divisor is the true count.
# --------------------------------------------------------------------------
def _make_sum_kernel(elem_fn, inv_count):
    def kernel(a_ref, b_ref, out_ref, acc):
        i = pl.program_id(0)

        @pl.when(i == 0)
        def _init():
            acc[...] = jnp.zeros_like(acc)

        v = elem_fn(a_ref[...], b_ref[...])                          # (tile, 128) f32
        part = jnp.sum(jnp.sum(v, axis=1, keepdims=True), axis=0, keepdims=True)
        acc[...] += part * inv_count

        @pl.when(i == pl.num_programs(0) - 1)
        def _fin():
            out_ref[...] = acc[...]

    return kernel


def _flat_to_tiles(x_flat, pad_value, dtype):
    m = x_flat.shape[0]
    rows = max(1, _cdiv(m, 128))
    tile = min(512, _round_up(rows, 8))
    r_pad = _round_up(rows, tile)
    xp = jnp.pad(x_flat.astype(dtype), (0, r_pad * 128 - m), constant_values=pad_value)
    return xp.reshape(r_pad, 128), tile


def _tiled_mean_pallas(elem_fn, a2d, b2d, tile, n_valid):
    rows, width = a2d.shape
    out = pl.pallas_call(
        _make_sum_kernel(elem_fn, 1.0 / float(n_valid)),
        out_shape=jax.ShapeDtypeStruct((1, 1), jnp.float32),
        grid=(rows // tile,),
        in_specs=[pl.BlockSpec((tile, width), lambda i: (i, 0)),
                  pl.BlockSpec((tile, width), lambda i: (i, 0))],
        out_specs=pl.BlockSpec(memory_space=pltpu.MemorySpace.VMEM),
        scratch_shapes=[pltpu.VMEM((1, 1), jnp.float32)],
        compiler_params=pltpu.CompilerParams(dimension_semantics=("arbitrary",)),
    )(a2d, b2d)
    return out[0, 0]


def _bce_elem(x, y):
    # stable BCE-with-logits; pad (x=-1e4, y=0) contributes exactly 0
    return jnp.maximum(x, 0.0) - x * y + jnp.log1p(jnp.exp(-jnp.abs(x)))


def _eq_elem(p, l):
    # pad (p=0, l=-1) contributes exactly 0
    return (p == l).astype(jnp.float32)


def _bce_with_logits_pallas(logits, targets):
    m = int(logits.size)
    x2d, tile = _flat_to_tiles(logits.reshape(-1), -1e4, jnp.float32)
    y2d, _ = _flat_to_tiles(targets.reshape(-1), 0.0, jnp.float32)
    return _tiled_mean_pallas(_bce_elem, x2d, y2d, tile, m)


def _accuracy_pallas(pred, label):
    m = int(pred.size)
    p2d, tile = _flat_to_tiles(pred.reshape(-1), 0, jnp.int32)
    l2d, _ = _flat_to_tiles(label.reshape(-1), -1, jnp.int32)
    return _tiled_mean_pallas(_eq_elem, p2d, l2d, tile, m)


# --------------------------------------------------------------------------
# Module wrapper (mirrors the PyTorch FewShotREModel API)
# --------------------------------------------------------------------------
class FewShotREModel:
    def __init__(self, my_sentence_encoder=None):
        # TODO(synk): sentence_encoder is an injected submodule (wrapped in nn.DataParallel
        # upstream); no architecture is defined in this module, so nothing to port here.
        self.sentence_encoder = my_sentence_encoder

    def forward(self, support, query, N, K, Q):
        # TODO(synk): abstract in the reference implementation; subclasses define it.
        raise NotImplementedError

    def loss(self, logits, label, Bi=False):
        if Bi:
            return _bce_with_logits_pallas(logits, label)
        # TODO(synk): nn.CrossEntropyLoss ignore_index=-100 is not handled (unused here).
        n = logits.shape[-1]
        loss, _ = _ce_loss_acc_pallas(logits.reshape(-1, n), label.reshape(-1))
        return loss

    def loss_and_accuracy(self, logits, label):
        """Fused single-launch CE loss + accuracy(argmax(logits), label)."""
        n = logits.shape[-1]
        return _ce_loss_acc_pallas(logits.reshape(-1, n), label.reshape(-1))

    def accuracy(self, pred, label):
        return _accuracy_pallas(pred, label)


# --------------------------------------------------------------------------
# Pure-JAX references for verification
# --------------------------------------------------------------------------
def _ce_ref(logits_2d, labels_1d):
    logp = jax.nn.log_softmax(logits_2d.astype(jnp.float32), axis=-1)
    picked = jnp.take_along_axis(logp, labels_1d[:, None], axis=-1)[:, 0]
    return -jnp.mean(picked)


def _bce_ref(x, y):
    x = x.astype(jnp.float32)
    y = y.astype(jnp.float32)
    return jnp.mean(jnp.maximum(x, 0.0) - x * y + jnp.log1p(jnp.exp(-jnp.abs(x))))


def _acc_ref(pred, label):
    return jnp.mean((pred.reshape(-1) == label.reshape(-1)).astype(jnp.float32))


if __name__ == "__main__":
    key = jax.random.PRNGKey(0)
    k1, k2, k3, k4, k5, k6 = jax.random.split(key, 6)

    B, N, Q = 2, 5, 1
    model = FewShotREModel()

    # ---- CrossEntropy path: logits (..., N) with leading dims (B, N*Q) ----
    logits = jax.random.normal(k1, (B, N * Q, N), dtype=jnp.float32)
    labels = jax.random.randint(k2, (B, N * Q), 0, N, dtype=jnp.int32)

    ce = jax.block_until_ready(model.loss(logits, labels, Bi=False))
    ce_ref = _ce_ref(logits.reshape(-1, N), labels.reshape(-1))
    assert jnp.allclose(ce, ce_ref, atol=1e-5, rtol=1e-4), (ce, ce_ref)

    # ---- fused loss + accuracy (single launch) ----
    pred = jnp.argmax(logits, axis=-1).astype(jnp.int32)
    ce2, acc2 = jax.block_until_ready(model.loss_and_accuracy(logits, labels))
    acc_ref_v = _acc_ref(pred, labels)
    assert jnp.allclose(ce2, ce_ref, atol=1e-5, rtol=1e-4), (ce2, ce_ref)
    assert jnp.allclose(acc2, acc_ref_v, atol=1e-6), (acc2, acc_ref_v)

    # ---- BCEWithLogits path ----
    bi_logits = jax.random.normal(k3, (B, N), dtype=jnp.float32)
    bi_labels = jax.random.bernoulli(k4, 0.5, (B, N)).astype(jnp.float32)
    bce = jax.block_until_ready(model.loss(bi_logits, bi_labels, Bi=True))
    bce_ref = _bce_ref(bi_logits, bi_labels)
    assert jnp.allclose(bce, bce_ref, atol=1e-5, rtol=1e-4), (bce, bce_ref)

    # ---- accuracy(pred, label) ----
    acc = jax.block_until_ready(model.accuracy(pred, labels))
    assert jnp.allclose(acc, acc_ref_v, atol=1e-6), (acc, acc_ref_v)

    # ---- exercise the multi-tile (grid > 1) reduction path ----
    logits_l = jax.random.normal(k5, (3, 100, 7), dtype=jnp.float32)
    labels_l = jax.random.randint(k6, (3, 100), 0, 7, dtype=jnp.int32)
    ce_l, acc_l = jax.block_until_ready(model.loss_and_accuracy(logits_l, labels_l))
    ce_l_ref = _ce_ref(logits_l.reshape(-1, 7), labels_l.reshape(-1))
    acc_l_ref = _acc_ref(jnp.argmax(logits_l, axis=-1), labels_l)
    assert jnp.allclose(ce_l, ce_l_ref, atol=1e-5, rtol=1e-4), (ce_l, ce_l_ref)
    assert jnp.allclose(acc_l, acc_l_ref, atol=1e-5), (acc_l, acc_l_ref)

    print("KERNEL_OK")
</pallas_src>

<mosaic_0001>
module attributes {stable_mosaic.version = 11 : i64} {
  func.func @kernel(%arg0: i32, %arg1: memref<16x128xf32, #tpu.memory_space<vmem>>, %arg2: memref<1x16xi32, #tpu.memory_space<vmem>>, %arg3: memref<1x1xf32, #tpu.memory_space<vmem>>, %arg4: memref<1x1xf32, #tpu.memory_space<vmem>>, %arg5: memref<1x1xf32, #tpu.memory_space<vmem>>, %arg6: memref<1x1xf32, #tpu.memory_space<vmem>>) attributes {dimension_semantics = [#tpu.dimension_semantics<arbitrary>], iteration_bounds = array<i64: 1>, scalar_prefetch = 0 : i64, scratch_operands = 2 : i64, tpu.core_type = #tpu.core_type<tc>, window_params = [{transform_indices = @transform_0, window_bounds = array<i64: 16, 128>}, {pipeline_mode = #tpu.pipeline_mode<synchronous>, transform_indices = @transform_1, window_bounds = array<i64: 1, 16>}, {pipeline_mode = #tpu.pipeline_mode<synchronous>, transform_indices = @transform_2, window_bounds = array<i64: 1, 1>}, {pipeline_mode = #tpu.pipeline_mode<synchronous>, transform_indices = @transform_3, window_bounds = array<i64: 1, 1>}]} {
    %c0_i32 = arith.constant 0 : i32
    %0 = arith.cmpi eq, %arg0, %c0_i32 : i32
    %1 = arith.extui %0 : i1 to i32
    %c0_i32_0 = arith.constant 0 : i32
    %2 = arith.cmpi ne, %1, %c0_i32_0 : i32
    scf.if %2 {
      %cst_24 = arith.constant 0.000000e+00 : f32
      %70 = vector.broadcast %cst_24 : f32 to vector<1x1xf32>
      %c0_25 = arith.constant 0 : index
      %c0_26 = arith.constant 0 : index
      %71 = vector.load %arg5[%c0_25, %c0_26] : memref<1x1xf32, #tpu.memory_space<vmem>>, vector<1x1xf32>
      tpu.vector_store %arg5[%c0_25, %c0_26], %70 {strides = array<i32>} : memref<1x1xf32, #tpu.memory_space<vmem>>, vector<1x1xf32>,
      %cst_27 = arith.constant 0.000000e+00 : f32
      %72 = vector.broadcast %cst_27 : f32 to vector<1x1xf32>
      %c0_28 = arith.constant 0 : index
      %c0_29 = arith.constant 0 : index
      %73 = vector.load %arg6[%c0_28, %c0_29] : memref<1x1xf32, #tpu.memory_space<vmem>>, vector<1x1xf32>
      tpu.vector_store %arg6[%c0_28, %c0_29], %72 {strides = array<i32>} : memref<1x1xf32, #tpu.memory_space<vmem>>, vector<1x1xf32>,
    } else {
    }
    %c0 = arith.constant 0 : index
    %c0_1 = arith.constant 0 : index
    %3 = vector.load %arg1[%c0, %c0_1] : memref<16x128xf32, #tpu.memory_space<vmem>>, vector<16x128xf32>
    %4 = arith.index_cast %arg0 : i32 to index
    %c0_2 = arith.constant 0 : index
    %5 = vector.load %arg2[%4, %c0_2] : memref<1x16xi32, #tpu.memory_space<vmem>>, vector<1x16xi32>
    %6 = arith.sitofp %5 : vector<1x16xi32> to vector<1x16xf32>
    %7 = vector.shape_cast %6 : vector<1x16xf32> to vector<1x16xf32>
    %8 = vector.broadcast %7 : vector<1x16xf32> to vector<16x16xf32>
    %9 = tpu.iota {dimensions = array<i32: 0>} : vector<16x16xi32>
    %10 = tpu.iota {dimensions = array<i32: 1>} : vector<16x16xi32>
    %11 = arith.cmpi eq, %9, %10 : vector<16x16xi32>
    %cst = arith.constant 0.000000e+00 : f32
    %12 = vector.broadcast %cst : f32 to vector<16x16xf32>
    %13 = arith.select %11, %8, %12 : vector<16x16xi1>, vector<16x16xf32>
    %cst_3 = arith.constant dense<0.000000e+00> : vector<16xf32>
    %14 = vector.multi_reduction <add>, %13, %cst_3 [1] : vector<16x16xf32> to vector<16xf32>
    %15 = vector.shape_cast %14 : vector<16xf32> to vector<16x1xf32>
    %c16_i32 = arith.constant 16 : i32
    %16 = arith.muli %arg0, %c16_i32 : i32
    %17 = tpu.iota {dimensions = array<i32: 0>} : vector<16x1xi32>
    %18 = vector.broadcast %16 : i32 to vector<16x1xi32>
    %19 = arith.addi %18, %17 : vector<16x1xi32>
    %c10_i32 = arith.constant 10 : i32
    %20 = vector.broadcast %c10_i32 : i32 to vector<16x1xi32>
    %21 = arith.cmpi slt, %19, %20 : vector<16x1xi32>
    %22 = arith.extui %21 : vector<16x1xi1> to vector<16x1xi32>
    %23 = arith.sitofp %22 : vector<16x1xi32> to vector<16x1xf32>
    %cst_4 = arith.constant dense<0xFF800000> : vector<16xf32>
    %24 = vector.multi_reduction <maximumf>, %3, %cst_4 [1] : vector<16x128xf32> to vector<16xf32>
    %25 = vector.shape_cast %24 : vector<16xf32> to vector<16x1xf32>
    %26 = vector.broadcast %25 : vector<16x1xf32> to vector<16x128xf32>
    %27 = arith.subf %3, %26 : vector<16x128xf32>
    %28 = math.exp %27 : vector<16x128xf32>
    %cst_5 = arith.constant dense<0.000000e+00> : vector<16xf32>
    %29 = vector.multi_reduction <add>, %28, %cst_5 [1] : vector<16x128xf32> to vector<16xf32>
    %30 = vector.shape_cast %29 : vector<16xf32> to vector<16x1xf32>
    %31 = math.log %30 : vector<16x1xf32>
    %32 = arith.addf %25, %31 : vector<16x1xf32>
    %33 = tpu.iota {dimensions = array<i32: 1>} : vector<16x128xi32>
    %34 = arith.sitofp %33 : vector<16x128xi32> to vector<16x128xf32>
    %35 = vector.broadcast %15 : vector<16x1xf32> to vector<16x128xf32>
    %36 = arith.cmpf oeq, %34, %35 : vector<16x128xf32>
    %cst_6 = arith.constant 0.000000e+00 : f32
    %37 = vector.broadcast %cst_6 : f32 to vector<16x128xf32>
    %38 = arith.select %36, %3, %37 : vector<16x128xi1>, vector<16x128xf32>
    %cst_7 = arith.constant dense<0.000000e+00> : vector<16xf32>
    %39 = vector.multi_reduction <add>, %38, %cst_7 [1] : vector<16x128xf32> to vector<16xf32>
    %40 = vector.shape_cast %39 : vector<16xf32> to vector<16x1xf32>
    %41 = arith.subf %32, %40 : vector<16x1xf32>
    %42 = arith.mulf %41, %23 : vector<16x1xf32>
    %43 = vector.broadcast %25 : vector<16x1xf32> to vector<16x128xf32>
    %44 = arith.cmpf oeq, %3, %43 : vector<16x128xf32>
    %cst_8 = arith.constant 1.280000e+02 : f32
    %45 = vector.broadcast %cst_8 : f32 to vector<16x128xf32>
    %46 = arith.select %44, %34, %45 : vector<16x128xi1>, vector<16x128xf32>
    %cst_9 = arith.constant dense<0x7F800000> : vector<16xf32>
    %47 = vector.multi_reduction <minimumf>, %46, %cst_9 [1] : vector<16x128xf32> to vector<16xf32>
    %48 = vector.shape_cast %47 : vector<16xf32> to vector<16x1xf32>
    %49 = arith.cmpf oeq, %48, %15 : vector<16x1xf32>
    %50 = arith.extui %49 : vector<16x1xi1> to vector<16x1xi32>
    %51 = arith.sitofp %50 : vector<16x1xi32> to vector<16x1xf32>
    %52 = arith.mulf %51, %23 : vector<16x1xf32>
    %c0_10 = arith.constant 0 : index
    %c0_11 = arith.constant 0 : index
    %53 = vector.load %arg5[%c0_10, %c0_11] : memref<1x1xf32, #tpu.memory_space<vmem>>, vector<1x1xf32>
    %cst_12 = arith.constant dense<0.000000e+00> : vector<1xf32>
    %54 = vector.multi_reduction <add>, %42, %cst_12 [0] : vector<16x1xf32> to vector<1xf32>
    %55 = vector.shape_cast %54 : vector<1xf32> to vector<1x1xf32>
    %cst_13 = arith.constant 1.000000e-01 : f32
    %56 = vector.broadcast %cst_13 : f32 to vector<1x1xf32>
    %57 = arith.mulf %55, %56 : vector<1x1xf32>
    %58 = arith.addf %53, %57 : vector<1x1xf32>
    %c0_14 = arith.constant 0 : index
    %c0_15 = arith.constant 0 : index
    %59 = vector.load %arg5[%c0_14, %c0_15] : memref<1x1xf32, #tpu.memory_space<vmem>>, vector<1x1xf32>
    tpu.vector_store %arg5[%c0_14, %c0_15], %58 {strides = array<i32>} : memref<1x1xf32, #tpu.memory_space<vmem>>, vector<1x1xf32>,
    %c0_16 = arith.constant 0 : index
    %c0_17 = arith.constant 0 : index
    %60 = vector.load %arg6[%c0_16, %c0_17] : memref<1x1xf32, #tpu.memory_space<vmem>>, vector<1x1xf32>
    %cst_18 = arith.constant dense<0.000000e+00> : vector<1xf32>
    %61 = vector.multi_reduction <add>, %52, %cst_18 [0] : vector<16x1xf32> to vector<1xf32>
    %62 = vector.shape_cast %61 : vector<1xf32> to vector<1x1xf32>
    %cst_19 = arith.constant 1.000000e-01 : f32
    %63 = vector.broadcast %cst_19 : f32 to vector<1x1xf32>
    %64 = arith.mulf %62, %63 : vector<1x1xf32>
    %65 = arith.addf %60, %64 : vector<1x1xf32>
    %c0_20 = arith.constant 0 : index
    %c0_21 = arith.constant 0 : index
    %66 = vector.load %arg6[%c0_20, %c0_21] : memref<1x1xf32, #tpu.memory_space<vmem>>, vector<1x1xf32>
    tpu.vector_store %arg6[%c0_20, %c0_21], %65 {strides = array<i32>} : memref<1x1xf32, #tpu.memory_space<vmem>>, vector<1x1xf32>,
    %c0_i32_22 = arith.constant 0 : i32
    %67 = arith.cmpi eq, %arg0, %c0_i32_22 : i32
    %68 = arith.extui %67 : i1 to i32
    %c0_i32_23 = arith.constant 0 : i32
    %69 = arith.cmpi ne, %68, %c0_i32_23 : i32
    scf.if %69 {
      %c0_24 = arith.constant 0 : index
      %c0_25 = arith.constant 0 : index
      %70 = vector.load %arg5[%c0_24, %c0_25] : memref<1x1xf32, #tpu.memory_space<vmem>>, vector<1x1xf32>
      %c0_26 = arith.constant 0 : index
      %c0_27 = arith.constant 0 : index
      %71 = vector.load %arg3[%c0_26, %c0_27] : memref<1x1xf32, #tpu.memory_space<vmem>>, vector<1x1xf32>
      tpu.vector_store %arg3[%c0_26, %c0_27], %70 {strides = array<i32>} : memref<1x1xf32, #tpu.memory_space<vmem>>, vector<1x1xf32>,
      %c0_28 = arith.constant 0 : index
      %c0_29 = arith.constant 0 : index
      %72 = vector.load %arg6[%c0_28, %c0_29] : memref<1x1xf32, #tpu.memory_space<vmem>>, vector<1x1xf32>
      %c0_30 = arith.constant 0 : index
      %c0_31 = arith.constant 0 : index
      %73 = vector.load %arg4[%c0_30, %c0_31] : memref<1x1xf32, #tpu.memory_space<vmem>>, vector<1x1xf32>
      tpu.vector_store %arg4[%c0_30, %c0_31], %72 {strides = array<i32>} : memref<1x1xf32, #tpu.memory_space<vmem>>, vector<1x1xf32>,
    } else {
    }
    return
  }
  func.func @transform_0(%arg0: i32) -> (i32, i32) {
    %c0_i32 = arith.constant 0 : i32
    %c0_i32_0 = arith.constant 0 : i32
    return %arg0, %c0_i32 : i32, i32
  }
  func.func @transform_1(%arg0: i32) -> (i32, i32) {
    %c0_i32 = arith.constant 0 : i32
    %c0_i32_0 = arith.constant 0 : i32
    %c0_i32_1 = arith.constant 0 : i32
    return %c0_i32, %c0_i32_0 : i32, i32
  }
  func.func @transform_2(%arg0: i32) -> (i32, i32) {
    %c0_i32 = arith.constant 0 : i32
    %c0_i32_0 = arith.constant 0 : i32
    %c0_i32_1 = arith.constant 0 : i32
    return %c0_i32, %c0_i32_0 : i32, i32
  }
  func.func @transform_3(%arg0: i32) -> (i32, i32) {
    %c0_i32 = arith.constant 0 : i32
    %c0_i32_0 = arith.constant 0 : i32
    %c0_i32_1 = arith.constant 0 : i32
    return %c0_i32, %c0_i32_0 : i32, i32
  }
}

</mosaic_0001>

<llo_original>
// kernel: tpu_custom_call.1
$region0: #{tpu_custom_call.1}
  #allocation0 [shape = 'u32[]', space=smem, size = 0x4, offset = 0x4, fixed_abs, tag = 'smem constant byte address 0x4 - core index']
  #allocation1 [shape = 'u32[144,128]{1,0:T(1,128)}', space=vmem, size = 0x12000, scoped, tag = 'internal scratch']
  #allocation2 [shape = 'f32[1,1]{1,0:T(1,128)}', space=vmem, size = 0x200, scoped, tag = 'scratch operand']
  #allocation3 [shape = 'f32[1,1]{1,0:T(1,128)}', space=vmem, size = 0x200, scoped, tag = 'scratch operand']
  %s0 = inlined_call_operand.hbm [shape: f32[16,128], index: 0, kind: input, shape index: {}]
  %s1 = inlined_call_operand.vmem [shape: s32[1,16], index: 1, kind: input, shape index: {}]
  %s2 = inlined_call_operand.hbm [shape: f32[1,1], index: 2, kind: output, shape index: {0}]
  %s3 = inlined_call_operand.hbm [shape: f32[1,1], index: 3, kind: output, shape index: {1}]
  %4 = xla_tuple %s2, %s3
  %s5 = sld [smem:[#allocation0]]
  $region38: #{tpu_custom_call.1} parent=0
    _
  %s7 = ssub.s32 1, %s5
  %s8 = scalar_select 0, %s7, %s5
  $region1: #{tpu_custom_call.1} parent=0
    #allocation4 [shape = 'u8[8192]{0}', space=vmem, size = 0x2000, scoped, tag = 'input window, operand 0, single buffered']
    #allocation5 [shape = 's32[1]{0}', space=sflag, size = 0x4, scoped, tag = 'scoped memory for tpu_custom_call.1']
    #allocation6 [shape = 's32[1]{0}', space=sflag, size = 0x4, scoped, tag = 'scoped memory for tpu_custom_call.1']
    #allocation7 [shape = 'u8[512]{0}', space=vmem, size = 0x400, scoped, tag = 'output window, operand 0, single buffered']
    #allocation8 [shape = 'u8[512]{0}', space=vmem, size = 0x400, scoped, tag = 'output window, operand 1, single buffered']
    #allocation9 [shape = 's32[1]{0}', space=sflag, size = 0x4, scoped, tag = 'scoped memory for tpu_custom_call.1']
    %9 = vsyncpa [#allocation5], 0
    %10 = vsyncpa [#allocation6], 0
    %11 = vsyncpa [#allocation9], 0
    // Predicated region
    $region2: #{tpu_custom_call.1} parent=1 // pred_check
      _
    $region3: #{tpu_custom_call.1} parent=1 // pred_check_branch
      %13 = sbr.rel (0) target = $region5
    $region4: #{tpu_custom_call.1} parent=1 // pred_region
      %s15 = ssub.s32 256, 256
      %16 = vsyncadd [#allocation5], %s15
      %s17 = sshll.u32 [#allocation4], 4
      %s18 = int_to_ptr.vmem [resolvable:$true] %s17
      %23 = dma.hbm_to_vmem [thread:$0]  %s0, 256, %s18, [#allocation5], 128, 128, 8
    $region5: #{tpu_custom_call.1} parent=1 // pred_fallthru
      _
    // Predicated region
    $region6: #{tpu_custom_call.1} parent=1 // pred_check
      _
    $region7: #{tpu_custom_call.1} parent=1 // pred_check_branch
      %25 = sbr.rel (0) target = $region9
    $region8: #{tpu_custom_call.1} parent=1 // pred_region
      _
    $region9: #{tpu_custom_call.1} parent=1 // pred_fallthru
      _
    // Predicated region
    $region10: #{tpu_custom_call.1} parent=1 // pred_check
      _
    $region11: #{tpu_custom_call.1} parent=1 // pred_check_branch
      %27 = sbr.rel (0) target = $region13
    $region12: #{tpu_custom_call.1} parent=1 // pred_region
      %28 = dma.done [#allocation5], 256
    $region13: #{tpu_custom_call.1} parent=1 // pred_fallthru
      _
    %p29 = scmp.eq.s32.totalorder 0, 0
    // Predicated region
    $region14: #{tpu_custom_call.1} parent=1 // pred_check
      %p30 = pneg %p29
    $region15: #{tpu_custom_call.1} parent=1 // pred_check_branch
      %32 = sbr.rel (%p30) target = $region17
    $region16: #{tpu_custom_call.1} parent=1 // pred_region
      %vm33 = vcmask 0
      %34 = vst.msk [vmem:[#allocation2] sm:$0x1] %vm33, 0.0
      %35 = vst.msk [vmem:[#allocation3] sm:$0x1] %vm33, 0.0
    $region17: #{tpu_custom_call.1} parent=1 // pred_fallthru
      _
    %v36 = vld [vmem:[#allocation4] sm:$0xff]
    %v37 = vld [vmem:[#allocation4 + $0x8] sm:$0xff]
    %v38 = vld [vmem:[%s1] sm:$0x1]
    %v39 = vcvt.s32.f32 %v38
    %v41 = vlaneseq
    %v42 = vshrl.u32 %v41, 7
    %v43 = vsub.s32 0, %v42
    %v44 = vrot.slane %v39, %v43
    %v46 = vlaneseq
    %v47 = vshrl.u32 %v46, 7
    %v48 = vadd.s32 %v47, 8
    %v49 = vlaneseq
    %v50 = vand.u32 %v49, 127
    %vm51 = vcmp.eq.s32.totalorder %v47, %v50
    %vm52 = vcmp.eq.s32.totalorder %v48, %v50
    %v53 = vsel %vm51, %v44, 0.0
    %v54 = vsel %vm52, %v44, 0.0
    %vm55 = vcmask 130048
    %v56 = vsel %vm55, %v53, 0.0
    %57 = vadd.xlane.f32.xlu0 %v56
    %v58 = vpop.xlane.xlu0 %57
    %v59 = vsel %vm55, %v54, 0.0
    %60 = vadd.xlane.f32.xlu0 %v59
    %v61 = vpop.xlane.xlu0 %60
    %s62 = smul.u32 0, 16
    %v63 = vstv %s62
    %v64 = vadd.s32 %v63, %v47
    %v65 = vadd.s32 %v63, %v48
    %vm66 = vcmp.lt.s32.totalorder %v64, 10
    %vm67 = vcmp.lt.s32.totalorder %v65, 10
    %v68 = vsel %vm66, 1, 0
    %v69 = vsel %vm67, 1, 0
    %v70 = vcvt.s32.f32 %v68
    %v71 = vcvt.s32.f32 %v69
    %72 = vmax.xlane.f32.xlu0 %v36
    %v73 = vpop.xlane.xlu0 %72
    %74 = vmax.xlane.f32.xlu0 %v37
    %v75 = vpop.xlane.xlu0 %74
    %v76 = vsub.f32 %v36, %v73
    %v77 = vsub.f32 %v37, %v75
    %v78 = vmul.f32 %v76, 1.442695
    %v79 = vpow.pop %v78
    %v80 = vmul.f32 %v77, 1.442695
    %v81 = vpow.pop %v80
    %82 = vadd.xlane.f32.xlu0 %v79
    %v83 = vpop.xlane.xlu0 %82
    %84 = vadd.xlane.f32.xlu0 %v81
    %v85 = vpop.xlane.xlu0 %84
    %v86 = vlog2.pop %v83
    %v87 = vmul.f32 %v86, 0.6931472
    %v88 = vlog2.pop %v85
    %v89 = vmul.f32 %v88, 0.6931472
    %v90 = vadd.f32 %v73, %v87
    %v91 = vadd.f32 %v75, %v89
    %v92 = vcvt.s32.f32 %v50
    %vm93 = vcmp.eq.f32.partialorder %v92, %v58
    %vm94 = vcmp.eq.f32.partialorder %v92, %v61
    %v95 = vsel %vm93, %v36, 0.0
    %v96 = vsel %vm94, %v37, 0.0
    %97 = vadd.xlane.f32.xlu0 %v95
    %v98 = vpop.xlane.xlu0 %97
    %99 = vadd.xlane.f32.xlu0 %v96
    %v100 = vpop.xlane.xlu0 %99
    %v101 = vsub.f32 %v90, %v98
    %v102 = vsub.f32 %v91, %v100
    %v103 = vmul.f32 %v101, %v70
    %v104 = vmul.f32 %v102, %v71
    %vm105 = vcmp.eq.f32.partialorder %v36, %v73
    %vm106 = vcmp.eq.f32.partialorder %v37, %v75
    %v107 = vsel %vm105, %v92, 128.0
    %v108 = vsel %vm106, %v92, 128.0
    %109 = vmin.xlane.f32.xlu0 %v107
    %v110 = vpop.xlane.xlu0 %109
    %111 = vmin.xlane.f32.xlu0 %v108
    %v112 = vpop.xlane.xlu0 %111
    %vm113 = vcmp.eq.f32.partialorder %v110, %v58
    %vm114 = vcmp.eq.f32.partialorder %v112, %v61
    %v115 = vsel %vm113, 1, 0
    %v116 = vsel %vm114, 1, 0
    %v117 = vcvt.s32.f32 %v115
    %v118 = vcvt.s32.f32 %v116
    %v119 = vmul.f32 %v117, %v70
    %v120 = vmul.f32 %v118, %v71
    %v121 = vld [vmem:[#allocation2] sm:$0x1]
    %v122 = vadd.f32 %v103, %v104
    %v123 = vrot.slane %v122, 4
    %v124 = vadd.f32 %v122, %v123
    %v125 = vrot.slane %v124, 2
    %v126 = vadd.f32 %v124, %v125
    %v127 = vrot.slane %v126, 1
    %v128 = vadd.f32 %v126, %v127
    %v129 = vmul.f32 %v128, 0.1
    %v130 = vadd.f32 %v121, %v129
    %vm131 = vcmask 0
    %132 = vst.msk [vmem:[#allocation2] sm:$0x1] %vm131, %v130
    %v133 = vld [vmem:[#allocation3] sm:$0x1]
    %v134 = vadd.f32 %v119, %v120
    %v135 = vrot.slane %v134, 4
    %v136 = vadd.f32 %v134, %v135
    %v137 = vrot.slane %v136, 2
    %v138 = vadd.f32 %v136, %v137
    %v139 = vrot.slane %v138, 1
    %v140 = vadd.f32 %v138, %v139
    %v141 = vmul.f32 %v140, 0.1
    %v142 = vadd.f32 %v133, %v141
    %143 = vst.msk [vmem:[#allocation3] sm:$0x1] %vm131, %v142
    // Predicated region
    $region18: #{tpu_custom_call.1} parent=1 // pred_check
      %p144 = pneg %p29
    $region19: #{tpu_custom_call.1} parent=1 // pred_check_branch
      %146 = sbr.rel (%p144) target = $region21
    $region20: #{tpu_custom_call.1} parent=1 // pred_region
      %v147 = vld [vmem:[#allocation2] sm:$0x1]
      %148 = vst.msk [vmem:[#allocation7] sm:$0x1] %vm131, %v147
      %v149 = vld [vmem:[#allocation3] sm:$0x1]
      %150 = vst.msk [vmem:[#allocation8] sm:$0x1] %vm131, %v149
    $region21: #{tpu_custom_call.1} parent=1 // pred_fallthru
      _
    // Predicated region
    $region22: #{tpu_custom_call.1} parent=1 // pred_check
      _
    $region23: #{tpu_custom_call.1} parent=1 // pred_check_branch
      %152 = sbr.rel (0) target = $region25
    $region24: #{tpu_custom_call.1} parent=1 // pred_region
      %s154 = ssub.s32 16, 16
      %155 = vsyncadd [#allocation6], %s154
      %s157 = sshll.u32 [#allocation7], 4
      %s158 = int_to_ptr.vmem [resolvable:$true] %s157
      %160 = dma.vmem_to_hbm [thread:$0]  %s158, 16, %s2, [#allocation6]
    $region25: #{tpu_custom_call.1} parent=1 // pred_fallthru
      _
    // Predicated region
    $region26: #{tpu_custom_call.1} parent=1 // pred_check
      _
    $region27: #{tpu_custom_call.1} parent=1 // pred_check_branch
      %162 = sbr.rel (0) target = $region29
    $region28: #{tpu_custom_call.1} parent=1 // pred_region
      %s164 = ssub.s32 16, 16
      %165 = vsyncadd [#allocation9], %s164
      %s167 = sshll.u32 [#allocation8], 4
      %s168 = int_to_ptr.vmem [resolvable:$true] %s167
      %170 = dma.vmem_to_hbm [thread:$0]  %s168, 16, %s3, [#allocation9]
    $region29: #{tpu_custom_call.1} parent=1 // pred_fallthru
      _
    // Predicated region
    $region30: #{tpu_custom_call.1} parent=1 // pred_check
      _
    $region31: #{tpu_custom_call.1} parent=1 // pred_check_branch
      %172 = sbr.rel (0) target = $region33
    $region32: #{tpu_custom_call.1} parent=1 // pred_region
      %173 = dma.done [#allocation6], 16
    $region33: #{tpu_custom_call.1} parent=1 // pred_fallthru
      _
    // Predicated region
    $region34: #{tpu_custom_call.1} parent=1 // pred_check
      _
    $region35: #{tpu_custom_call.1} parent=1 // pred_check_branch
      %175 = sbr.rel (0) target = $region37
    $region36: #{tpu_custom_call.1} parent=1 // pred_region
      %176 = dma.done [#allocation9], 16
    $region37: #{tpu_custom_call.1} parent=1 // pred_fallthru
      _
    %177 = vsyncpa [#allocation5], 1
    %178 = vsyncpa [#allocation6], 1
    %179 = vsyncpa [#allocation9], 1

</llo_original>
